<compile_context>
chip_gen: v7x
topology: tpu7x:2x2x1
jax: 0.10.0
libtpu: 0.0.40
codegen_flags: <defaults>
</compile_context>

<pallas_src>
import functools

import jax
import jax.numpy as jnp
from jax.experimental import pallas as pl
from jax.experimental.pallas import tpu as pltpu


def _cdiv(a, b):
    return -(-a // b)


def _round_up(x, m):
    return (x + m - 1) // m * m


def dueling_dqn_kernel(x_ref, w1_ref, b1_ref, g_ref, beta_ref, wh_ref, bh_ref,
                       q_ref, part_ref, *, batch, block_b, n_actions, has_pad):
    # ---- fc1: bf16 operands on the MXU, f32 accumulation; + bias, ReLU ----
    h = jnp.dot(x_ref[...], w1_ref[...], preferred_element_type=jnp.float32)
    h = jnp.maximum(h + b1_ref[...], 0.0)

    # ---- LayerNorm (eps=1e-5), two-pass stats in f32 (no E[x^2]-E[x]^2 cancel) ----
    hdim = h.shape[-1]
    mean = jnp.sum(h, axis=-1, keepdims=True) * (1.0 / hdim)
    c = h - mean
    var = jnp.sum(c * c, axis=-1, keepdims=True) * (1.0 / hdim)
    h = c * jax.lax.rsqrt(var + 1e-5)
    h = h * g_ref[...] + beta_ref[...]

    # Dropout: eval-mode identity (matches module.eval()).
    # TODO(synk): training-mode dropout (pltpu.prng_random_bits mask + 1/(1-p) scale).

    # ---- fused value|advantage head: single lane-dense bf16 matmul, N = 128 ----
    # head[:, 0]    = value
    # head[:, 1..A] = value + advantage   (value folded into weights/bias)
    # head[:, A+1:] = 0                   (zero padding lanes)
    head = jnp.dot(h.astype(jnp.bfloat16), wh_ref[...],
                   preferred_element_type=jnp.float32) + bh_ref[...]

    # lane-dense, full-width unmasked store; bf16 halves HBM writeback.
    q_ref[...] = head.astype(q_ref.dtype)

    # ---- per-tile partial column sums for the global mean(advantage) ----
    # Only a sublane reduce per tile; no resident accumulator, so the grid axis
    # stays "parallel".  Column weighting / scaling is done in the wrapper.
    if has_pad:
        i = pl.program_id(0)
        last = pl.num_programs(0) - 1

        @pl.when(i != last)
        def _plain():
            psum = jnp.sum(head, axis=0, keepdims=True)
            part_ref[...] = jnp.broadcast_to(psum, part_ref.shape)

        @pl.when(i == last)
        def _masked():
            # pad rows only ever live in the last tile; mask them out here.
            row = i * block_b + jax.lax.broadcasted_iota(jnp.int32, (block_b, 1), 0)
            w = (row < batch).astype(jnp.float32)
            psum = jnp.sum(head * w, axis=0, keepdims=True)
            part_ref[...] = jnp.broadcast_to(psum, part_ref.shape)
    else:
        psum = jnp.sum(head, axis=0, keepdims=True)
        part_ref[...] = jnp.broadcast_to(psum, part_ref.shape)


def _prepare(params):
    """Fold the value + advantage heads into one lane-dense (padded-to-128) weight."""
    w1, b1, gamma, beta, wv, bv, wa, ba = params
    hidden = w1.shape[1]
    n_actions = wa.shape[1]
    npad = _round_up(1 + n_actions, 128)

    wh = jnp.zeros((hidden, npad), jnp.float32)
    wh = wh.at[:, 0:1].set(wv)                     # col 0: value
    wh = wh.at[:, 1:1 + n_actions].set(wa + wv)    # cols 1..A: advantage + value
    bh = jnp.zeros((1, npad), jnp.float32)
    bh = bh.at[:, 0:1].set(bv)
    bh = bh.at[:, 1:1 + n_actions].set(ba + bv)

    # bf16 matmul operands (halves x/weight DMA traffic; MXU is bf16-native).
    return (w1.astype(jnp.bfloat16), b1, gamma, beta,
            wh.astype(jnp.bfloat16), bh, n_actions, npad)


def _pick_block_b(batch):
    # Balanced tiles: avoid padding up to a whole extra 512-row tile, and make
    # sure larger batches produce >= 2 tiles so v7x's two TensorCores both work.
    num_tiles = max(1, _cdiv(batch, 512))
    if num_tiles == 1 and batch > 256:
        num_tiles = 2
    return _round_up(_cdiv(batch, num_tiles), 8)


@functools.partial(jax.jit, static_argnames=("block_b",))
def dueling_dqn_forward(x, params, *, block_b=None):
    w1_bf, b1, gamma, beta, wh_bf, bh, n_actions, npad = _prepare(params)
    batch, in_dim = x.shape
    hidden = w1_bf.shape[1]

    if block_b is None:
        block_b = _pick_block_b(batch)
    assert block_b % 8 == 0, "block_b must be a multiple of 8 sublanes"
    num_tiles = _cdiv(batch, block_b)
    b_pad = num_tiles * block_b
    has_pad = b_pad != batch

    x_bf = x.astype(jnp.bfloat16)
    if has_pad:
        x_bf = jnp.zeros((b_pad, in_dim), jnp.bfloat16).at[:batch].set(x_bf)

    kernel = functools.partial(dueling_dqn_kernel, batch=batch, block_b=block_b,
                               n_actions=n_actions, has_pad=has_pad)

    cost = pl.CostEstimate(
        flops=2 * b_pad * hidden * (in_dim + npad),
        transcendentals=b_pad,  # one rsqrt per row (LayerNorm)
        bytes_accessed=(x_bf.size * 2 + w1_bf.size * 2 + wh_bf.size * 2
                        + (b1.size + gamma.size + beta.size + bh.size) * 4
                        + b_pad * npad * 2              # bf16 q writeback
                        + num_tiles * 8 * npad * 4),    # per-tile partials
    )

    # NOTE: constant-weight blocks could use pipeline_mode=pl.Buffered(1) to
    # avoid double-buffering resident weights on v7x's smaller VMEM; the shapes
    # here are far below the limit so we only raise vmem_limit_bytes instead.
    q_pad, partials = pl.pallas_call(
        kernel,
        out_shape=(
            jax.ShapeDtypeStruct((b_pad, npad), jnp.bfloat16),        # q_pre (bf16)
            jax.ShapeDtypeStruct((num_tiles * 8, npad), jnp.float32),  # per-tile col sums
        ),
        grid_spec=pltpu.PrefetchScalarGridSpec(
            num_scalar_prefetch=0,
            grid=(num_tiles,),
            in_specs=[
                pl.BlockSpec((block_b, in_dim), lambda i: (i, 0)),   # x tile
                pl.BlockSpec((in_dim, hidden), lambda i: (0, 0)),    # w1 (bf16)
                pl.BlockSpec((1, hidden), lambda i: (0, 0)),         # b1
                pl.BlockSpec((1, hidden), lambda i: (0, 0)),         # gamma
                pl.BlockSpec((1, hidden), lambda i: (0, 0)),         # beta
                pl.BlockSpec((hidden, npad), lambda i: (0, 0)),      # fused head W (bf16)
                pl.BlockSpec((1, npad), lambda i: (0, 0)),           # fused head bias
            ],
            out_specs=[
                pl.BlockSpec((block_b, npad), lambda i: (i, 0)),     # q_pre tile
                pl.BlockSpec((8, npad), lambda i: (i, 0)),           # per-tile partial block
            ],
        ),
        compiler_params=pltpu.CompilerParams(
            # No cross-tile carries remain -> batch axis is fully parallel
            # (megacore sharding on v7x; no-op on single-TC v5e/v6e).
            dimension_semantics=("parallel",),
            vmem_limit_bytes=48 * 1024 * 1024,
        ),
        cost_estimate=cost,
    )(x_bf, w1_bf, b1, gamma, beta, wh_bf, bh)

    # ---- jit-fused epilogue ----
    # column sums over all tiles (rows within a tile's 8-row block are identical)
    col_sums = jnp.sum(partials.reshape(num_tiles, 8, npad)[:, 0, :], axis=0)  # (npad,)
    # sum(advantage) = sum(head cols 1..A) - A * sum(head col 0)
    adv_sum = jnp.sum(col_sums[1:1 + n_actions]) - n_actions * col_sums[0]
    adv_mean = adv_sum * (1.0 / (batch * n_actions))

    # q = (value + advantage) - mean(advantage)
    return q_pad[:batch, 1:1 + n_actions].astype(jnp.float32) - adv_mean


def init_params(key, input_dim, hidden_dim, output_dim):
    k1, k2, k3, k4, k5, k6 = jax.random.split(key, 6)
    # QuaternionLinear uses torch.randn for both weight [in, out] and bias [out]
    w1 = jax.random.normal(k1, (input_dim, hidden_dim), jnp.float32)
    b1 = jax.random.normal(k2, (1, hidden_dim), jnp.float32)
    # LayerNorm affine params (torch default: weight=1, bias=0)
    gamma = jnp.ones((1, hidden_dim), jnp.float32)
    beta = jnp.zeros((1, hidden_dim), jnp.float32)
    wv = jax.random.normal(k3, (hidden_dim, 1), jnp.float32)
    bv = jax.random.normal(k4, (1, 1), jnp.float32)
    wa = jax.random.normal(k5, (hidden_dim, output_dim), jnp.float32)
    ba = jax.random.normal(k6, (1, output_dim), jnp.float32)
    return (w1, b1, gamma, beta, wv, bv, wa, ba)


def reference_forward_f32(x, params):
    # exact f32 emulation of the torch module (no bf16 rounding)
    w1, b1, gamma, beta, wv, bv, wa, ba = params
    h = jnp.maximum(x @ w1 + b1, 0.0)
    mean = jnp.mean(h, axis=-1, keepdims=True)
    var = jnp.mean((h - mean) ** 2, axis=-1, keepdims=True)
    h = (h - mean) / jnp.sqrt(var + 1e-5) * gamma + beta
    value = h @ wv + bv
    adv = h @ wa + ba
    return value + adv - jnp.mean(adv)


def reference_forward_matched(x, params):
    # mirrors the kernel numerics: bf16 matmul operands, fused/folded head,
    # f32 two-pass LayerNorm, bf16 q storage, f32 advantage mean.
    w1_bf, b1, gamma, beta, wh_bf, bh, n_actions, _ = _prepare(params)
    h = jnp.dot(x.astype(jnp.bfloat16), w1_bf,
                preferred_element_type=jnp.float32) + b1
    h = jnp.maximum(h, 0.0)
    mean = jnp.mean(h, axis=-1, keepdims=True)
    c = h - mean
    var = jnp.mean(c * c, axis=-1, keepdims=True)
    h = c * jax.lax.rsqrt(var + 1e-5) * gamma + beta
    head = jnp.dot(h.astype(jnp.bfloat16), wh_bf,
                   preferred_element_type=jnp.float32) + bh
    value = head[:, 0:1]
    q_pre = head[:, 1:1 + n_actions]          # value + advantage (f32)
    adv_mean = jnp.mean(q_pre - value)        # f32, like the kernel partials
    q_stored = head.astype(jnp.bfloat16).astype(jnp.float32)[:, 1:1 + n_actions]
    return q_stored - adv_mean


if __name__ == "__main__":
    B, input_dim, hidden_dim, output_dim = 2, 16, 32, 4

    key = jax.random.PRNGKey(0)
    kx, kp = jax.random.split(key)
    x = jax.random.normal(kx, (B, input_dim), jnp.float32)
    params = init_params(kp, input_dim, hidden_dim, output_dim)

    out = jax.block_until_ready(dueling_dqn_forward(x, params))
    assert out.shape == (B, output_dim)

    # primary check: reference with identical bf16-matmul / bf16-store numerics
    ref = reference_forward_matched(x, params)
    assert jnp.allclose(out, ref, atol=2e-2, rtol=2e-2), "mismatch vs matched reference"

    # sanity check vs full-f32 torch semantics (gap is only bf16 rounding)
    ref32 = reference_forward_f32(x, params)
    assert jnp.allclose(out, ref32, atol=5e-1, rtol=1e-1), "mismatch vs f32 reference"

    print("KERNEL_OK")
</pallas_src>

<mosaic_0001>
module attributes {stable_mosaic.version = 11 : i64} {
  func.func @dueling_dqn_kernel(%arg0: i32, %arg1: memref<8x16xbf16, #tpu.memory_space<vmem>>, %arg2: memref<16x32xbf16, #tpu.memory_space<vmem>>, %arg3: memref<1x32xf32, #tpu.memory_space<vmem>>, %arg4: memref<1x32xf32, #tpu.memory_space<vmem>>, %arg5: memref<1x32xf32, #tpu.memory_space<vmem>>, %arg6: memref<32x128xbf16, #tpu.memory_space<vmem>>, %arg7: memref<1x128xf32, #tpu.memory_space<vmem>>, %arg8: memref<8x128xbf16, #tpu.memory_space<vmem>>, %arg9: memref<8x128xf32, #tpu.memory_space<vmem>>) attributes {dimension_semantics = [#tpu.dimension_semantics<parallel>], iteration_bounds = array<i64: 1>, scalar_prefetch = 0 : i64, scratch_operands = 0 : i64, tpu.core_type = #tpu.core_type<tc>, window_params = [{transform_indices = @transform_0, window_bounds = array<i64: 8, 16>}, {pipeline_mode = #tpu.pipeline_mode<synchronous>, transform_indices = @transform_1, window_bounds = array<i64: 16, 32>}, {pipeline_mode = #tpu.pipeline_mode<synchronous>, transform_indices = @transform_2, window_bounds = array<i64: 1, 32>}, {pipeline_mode = #tpu.pipeline_mode<synchronous>, transform_indices = @transform_3, window_bounds = array<i64: 1, 32>}, {pipeline_mode = #tpu.pipeline_mode<synchronous>, transform_indices = @transform_4, window_bounds = array<i64: 1, 32>}, {pipeline_mode = #tpu.pipeline_mode<synchronous>, transform_indices = @transform_5, window_bounds = array<i64: 32, 128>}, {pipeline_mode = #tpu.pipeline_mode<synchronous>, transform_indices = @transform_6, window_bounds = array<i64: 1, 128>}, {transform_indices = @transform_7, window_bounds = array<i64: 8, 128>}, {transform_indices = @transform_8, window_bounds = array<i64: 8, 128>}]} {
    %c0 = arith.constant 0 : index
    %c0_0 = arith.constant 0 : index
    %0 = vector.load %arg1[%c0, %c0_0] : memref<8x16xbf16, #tpu.memory_space<vmem>>, vector<8x16xbf16>
    %c0_1 = arith.constant 0 : index
    %c0_2 = arith.constant 0 : index
    %1 = vector.load %arg2[%c0_1, %c0_2] : memref<16x32xbf16, #tpu.memory_space<vmem>>, vector<16x32xbf16>
    %cst = arith.constant dense<0.000000e+00> : vector<8x32xf32>
    %2 = tpu.matmul %0, %1, %cst {dimension_numbers = #tpu.dot_dimension_numbers<[1], [0], [0], [1], [0, 0, 1, 1], [], []>} : vector<8x16xbf16>, vector<16x32xbf16>, vector<8x32xf32> -> vector<8x32xf32>
    %c0_3 = arith.constant 0 : index
    %c0_4 = arith.constant 0 : index
    %3 = vector.load %arg3[%c0_3, %c0_4] : memref<1x32xf32, #tpu.memory_space<vmem>>, vector<1x32xf32>
    %4 = vector.broadcast %3 : vector<1x32xf32> to vector<8x32xf32>
    %5 = arith.addf %2, %4 : vector<8x32xf32>
    %cst_5 = arith.constant 0.000000e+00 : f32
    %6 = vector.broadcast %cst_5 : f32 to vector<8x32xf32>
    %7 = arith.maximumf %5, %6 : vector<8x32xf32>
    %cst_6 = arith.constant dense<0.000000e+00> : vector<8xf32>
    %8 = vector.multi_reduction <add>, %7, %cst_6 [1] : vector<8x32xf32> to vector<8xf32>
    %9 = vector.shape_cast %8 : vector<8xf32> to vector<8x1xf32>
    %cst_7 = arith.constant 3.125000e-02 : f32
    %10 = vector.broadcast %cst_7 : f32 to vector<8x1xf32>
    %11 = arith.mulf %9, %10 : vector<8x1xf32>
    %12 = vector.broadcast %11 : vector<8x1xf32> to vector<8x32xf32>
    %13 = arith.subf %7, %12 : vector<8x32xf32>
    %14 = arith.mulf %13, %13 : vector<8x32xf32>
    %cst_8 = arith.constant dense<0.000000e+00> : vector<8xf32>
    %15 = vector.multi_reduction <add>, %14, %cst_8 [1] : vector<8x32xf32> to vector<8xf32>
    %16 = vector.shape_cast %15 : vector<8xf32> to vector<8x1xf32>
    %cst_9 = arith.constant 3.125000e-02 : f32
    %17 = vector.broadcast %cst_9 : f32 to vector<8x1xf32>
    %18 = arith.mulf %16, %17 : vector<8x1xf32>
    %cst_10 = arith.constant 9.99999974E-6 : f32
    %19 = vector.broadcast %cst_10 : f32 to vector<8x1xf32>
    %20 = arith.addf %18, %19 : vector<8x1xf32>
    %21 = math.rsqrt %20 : vector<8x1xf32>
    %22 = vector.broadcast %21 : vector<8x1xf32> to vector<8x32xf32>
    %23 = arith.mulf %13, %22 : vector<8x32xf32>
    %c0_11 = arith.constant 0 : index
    %c0_12 = arith.constant 0 : index
    %24 = vector.load %arg4[%c0_11, %c0_12] : memref<1x32xf32, #tpu.memory_space<vmem>>, vector<1x32xf32>
    %25 = vector.broadcast %24 : vector<1x32xf32> to vector<8x32xf32>
    %26 = arith.mulf %23, %25 : vector<8x32xf32>
    %c0_13 = arith.constant 0 : index
    %c0_14 = arith.constant 0 : index
    %27 = vector.load %arg5[%c0_13, %c0_14] : memref<1x32xf32, #tpu.memory_space<vmem>>, vector<1x32xf32>
    %28 = vector.broadcast %27 : vector<1x32xf32> to vector<8x32xf32>
    %29 = arith.addf %26, %28 : vector<8x32xf32>
    %30 = arith.truncf %29 : vector<8x32xf32> to vector<8x32xbf16>
    %c0_15 = arith.constant 0 : index
    %c0_16 = arith.constant 0 : index
    %31 = vector.load %arg6[%c0_15, %c0_16] : memref<32x128xbf16, #tpu.memory_space<vmem>>, vector<32x128xbf16>
    %cst_17 = arith.constant dense<0.000000e+00> : vector<8x128xf32>
    %32 = tpu.matmul %30, %31, %cst_17 {dimension_numbers = #tpu.dot_dimension_numbers<[1], [0], [0], [1], [0, 0, 1, 1], [], []>} : vector<8x32xbf16>, vector<32x128xbf16>, vector<8x128xf32> -> vector<8x128xf32>
    %c0_18 = arith.constant 0 : index
    %c0_19 = arith.constant 0 : index
    %33 = vector.load %arg7[%c0_18, %c0_19] : memref<1x128xf32, #tpu.memory_space<vmem>>, vector<1x128xf32>
    %34 = vector.broadcast %33 : vector<1x128xf32> to vector<8x128xf32>
    %35 = arith.addf %32, %34 : vector<8x128xf32>
    %36 = arith.truncf %35 : vector<8x128xf32> to vector<8x128xbf16>
    %c0_20 = arith.constant 0 : index
    %c0_21 = arith.constant 0 : index
    %37 = vector.load %arg8[%c0_20, %c0_21] : memref<8x128xbf16, #tpu.memory_space<vmem>>, vector<8x128xbf16>
    tpu.vector_store %arg8[%c0_20, %c0_21], %36 {strides = array<i32>} : memref<8x128xbf16, #tpu.memory_space<vmem>>, vector<8x128xbf16>,
    %c0_i32 = arith.constant 0 : i32
    %38 = arith.cmpi ne, %arg0, %c0_i32 : i32
    %39 = arith.extui %38 : i1 to i32
    %c0_i32_22 = arith.constant 0 : i32
    %40 = arith.cmpi ne, %39, %c0_i32_22 : i32
    scf.if %40 {
      %cst_25 = arith.constant dense<0.000000e+00> : vector<128xf32>
      %44 = vector.multi_reduction <add>, %35, %cst_25 [0] : vector<8x128xf32> to vector<128xf32>
      %45 = vector.shape_cast %44 : vector<128xf32> to vector<1x128xf32>
      %46 = vector.shape_cast %45 : vector<1x128xf32> to vector<1x128xf32>
      %47 = vector.broadcast %46 : vector<1x128xf32> to vector<8x128xf32>
      %c0_26 = arith.constant 0 : index
      %c0_27 = arith.constant 0 : index
      %48 = vector.load %arg9[%c0_26, %c0_27] : memref<8x128xf32, #tpu.memory_space<vmem>>, vector<8x128xf32>
      tpu.vector_store %arg9[%c0_26, %c0_27], %47 {strides = array<i32>} : memref<8x128xf32, #tpu.memory_space<vmem>>, vector<8x128xf32>,
    } else {
    }
    %c0_i32_23 = arith.constant 0 : i32
    %41 = arith.cmpi eq, %arg0, %c0_i32_23 : i32
    %42 = arith.extui %41 : i1 to i32
    %c0_i32_24 = arith.constant 0 : i32
    %43 = arith.cmpi ne, %42, %c0_i32_24 : i32
    scf.if %43 {
      %c8_i32 = arith.constant 8 : i32
      %44 = arith.muli %arg0, %c8_i32 : i32
      %45 = tpu.iota {dimensions = array<i32: 0>} : vector<8x1xi32>
      %46 = vector.broadcast %44 : i32 to vector<8x1xi32>
      %47 = arith.addi %46, %45 : vector<8x1xi32>
      %c2_i32 = arith.constant 2 : i32
      %48 = vector.broadcast %c2_i32 : i32 to vector<8x1xi32>
      %49 = arith.cmpi slt, %47, %48 : vector<8x1xi32>
      %50 = arith.extui %49 : vector<8x1xi1> to vector<8x1xi32>
      %51 = arith.sitofp %50 : vector<8x1xi32> to vector<8x1xf32>
      %52 = vector.broadcast %51 : vector<8x1xf32> to vector<8x128xf32>
      %53 = arith.mulf %35, %52 : vector<8x128xf32>
      %cst_25 = arith.constant dense<0.000000e+00> : vector<128xf32>
      %54 = vector.multi_reduction <add>, %53, %cst_25 [0] : vector<8x128xf32> to vector<128xf32>
      %55 = vector.shape_cast %54 : vector<128xf32> to vector<1x128xf32>
      %56 = vector.shape_cast %55 : vector<1x128xf32> to vector<1x128xf32>
      %57 = vector.broadcast %56 : vector<1x128xf32> to vector<8x128xf32>
      %c0_26 = arith.constant 0 : index
      %c0_27 = arith.constant 0 : index
      %58 = vector.load %arg9[%c0_26, %c0_27] : memref<8x128xf32, #tpu.memory_space<vmem>>, vector<8x128xf32>
      tpu.vector_store %arg9[%c0_26, %c0_27], %57 {strides = array<i32>} : memref<8x128xf32, #tpu.memory_space<vmem>>, vector<8x128xf32>,
    } else {
    }
    return
  }
  func.func @transform_0(%arg0: i32) -> (i32, i32) {
    %c0_i32 = arith.constant 0 : i32
    %c0_i32_0 = arith.constant 0 : i32
    return %arg0, %c0_i32 : i32, i32
  }
  func.func @transform_1(%arg0: i32) -> (i32, i32) {
    %c0_i32 = arith.constant 0 : i32
    %c0_i32_0 = arith.constant 0 : i32
    %c0_i32_1 = arith.constant 0 : i32
    return %c0_i32, %c0_i32_0 : i32, i32
  }
  func.func @transform_2(%arg0: i32) -> (i32, i32) {
    %c0_i32 = arith.constant 0 : i32
    %c0_i32_0 = arith.constant 0 : i32
    %c0_i32_1 = arith.constant 0 : i32
    return %c0_i32, %c0_i32_0 : i32, i32
  }
  func.func @transform_3(%arg0: i32) -> (i32, i32) {
    %c0_i32 = arith.constant 0 : i32
    %c0_i32_0 = arith.constant 0 : i32
    %c0_i32_1 = arith.constant 0 : i32
    return %c0_i32, %c0_i32_0 : i32, i32
  }
  func.func @transform_4(%arg0: i32) -> (i32, i32) {
    %c0_i32 = arith.constant 0 : i32
    %c0_i32_0 = arith.constant 0 : i32
    %c0_i32_1 = arith.constant 0 : i32
    return %c0_i32, %c0_i32_0 : i32, i32
  }
  func.func @transform_5(%arg0: i32) -> (i32, i32) {
    %c0_i32 = arith.constant 0 : i32
    %c0_i32_0 = arith.constant 0 : i32
    %c0_i32_1 = arith.constant 0 : i32
    return %c0_i32, %c0_i32_0 : i32, i32
  }
  func.func @transform_6(%arg0: i32) -> (i32, i32) {
    %c0_i32 = arith.constant 0 : i32
    %c0_i32_0 = arith.constant 0 : i32
    %c0_i32_1 = arith.constant 0 : i32
    return %c0_i32, %c0_i32_0 : i32, i32
  }
  func.func @transform_7(%arg0: i32) -> (i32, i32) {
    %c0_i32 = arith.constant 0 : i32
    %c0_i32_0 = arith.constant 0 : i32
    return %arg0, %c0_i32 : i32, i32
  }
  func.func @transform_8(%arg0: i32) -> (i32, i32) {
    %c0_i32 = arith.constant 0 : i32
    %c0_i32_0 = arith.constant 0 : i32
    return %arg0, %c0_i32 : i32, i32
  }
}

</mosaic_0001>

<llo_original>
// kernel: dueling_dqn_forward.1
$region0: #{dueling_dqn_forward.1}
  #allocation0 [shape = 'u32[]', space=smem, size = 0x4, offset = 0x4, fixed_abs, tag = 'smem constant byte address 0x4 - core index']
  #allocation1 [shape = 'u32[144,128]{1,0:T(1,128)}', space=vmem, size = 0x12000, scoped, tag = 'internal scratch']
  %s0 = inlined_call_operand.vmem [shape: bf16[8,16], index: 0, kind: input, shape index: {}]
  %s1 = inlined_call_operand.vmem [shape: bf16[16,32], index: 1, kind: input, shape index: {}]
  %s2 = inlined_call_operand.vmem [shape: f32[1,32], index: 2, kind: input, shape index: {}]
  %s3 = inlined_call_operand.vmem [shape: f32[1,32], index: 3, kind: input, shape index: {}]
  %s4 = inlined_call_operand.vmem [shape: f32[1,32], index: 4, kind: input, shape index: {}]
  %s5 = inlined_call_operand.vmem [shape: bf16[32,128], index: 5, kind: input, shape index: {}]
  %s6 = inlined_call_operand.vmem [shape: f32[1,128], index: 6, kind: input, shape index: {}]
  %s7 = inlined_call_operand.vmem [shape: bf16[8,128], index: 7, kind: output, shape index: {0}]
  %s8 = inlined_call_operand.vmem [shape: f32[8,128], index: 8, kind: output, shape index: {1}]
  %9 = xla_tuple %s7, %s8
  %s10 = sld [smem:[#allocation0]]
  $region54: #{dueling_dqn_forward.1} parent=0
    _
  %s12 = ssub.s32 1, %s10
  %s13 = scalar_select 0, %s12, %s10
  // Predicated region
  $region2: #{dueling_dqn_forward.1} parent=0 // pred_check
    _
  $region3: #{dueling_dqn_forward.1} parent=0 // pred_check_branch
    %15 = sbr.rel (0) target = $region5
  $region4: #{dueling_dqn_forward.1} parent=0 // pred_region
    _
  $region5: #{dueling_dqn_forward.1} parent=0 // pred_fallthru
    _
  // Predicated region
  $region6: #{dueling_dqn_forward.1} parent=0 // pred_check
    _
  $region7: #{dueling_dqn_forward.1} parent=0 // pred_check_branch
    %17 = sbr.rel (0) target = $region9
  $region8: #{dueling_dqn_forward.1} parent=0 // pred_region
    _
  $region9: #{dueling_dqn_forward.1} parent=0 // pred_fallthru
    _
  // Predicated region
  $region10: #{dueling_dqn_forward.1} parent=0 // pred_check
    _
  $region11: #{dueling_dqn_forward.1} parent=0 // pred_check_branch
    %19 = sbr.rel (0) target = $region13
  $region12: #{dueling_dqn_forward.1} parent=0 // pred_region
    _
  $region13: #{dueling_dqn_forward.1} parent=0 // pred_fallthru
    _
  // Predicated region
  $region14: #{dueling_dqn_forward.1} parent=0 // pred_check
    _
  $region15: #{dueling_dqn_forward.1} parent=0 // pred_check_branch
    %21 = sbr.rel (0) target = $region17
  $region16: #{dueling_dqn_forward.1} parent=0 // pred_region
    _
  $region17: #{dueling_dqn_forward.1} parent=0 // pred_fallthru
    _
  // Predicated region
  $region18: #{dueling_dqn_forward.1} parent=0 // pred_check
    _
  $region19: #{dueling_dqn_forward.1} parent=0 // pred_check_branch
    %23 = sbr.rel (0) target = $region21
  $region20: #{dueling_dqn_forward.1} parent=0 // pred_region
    _
  $region21: #{dueling_dqn_forward.1} parent=0 // pred_fallthru
    _
  // Predicated region
  $region22: #{dueling_dqn_forward.1} parent=0 // pred_check
    _
  $region23: #{dueling_dqn_forward.1} parent=0 // pred_check_branch
    %25 = sbr.rel (0) target = $region25
  $region24: #{dueling_dqn_forward.1} parent=0 // pred_region
    _
  $region25: #{dueling_dqn_forward.1} parent=0 // pred_fallthru
    _
  // Predicated region
  $region26: #{dueling_dqn_forward.1} parent=0 // pred_check
    _
  $region27: #{dueling_dqn_forward.1} parent=0 // pred_check_branch
    %27 = sbr.rel (0) target = $region29
  $region28: #{dueling_dqn_forward.1} parent=0 // pred_region
    _
  $region29: #{dueling_dqn_forward.1} parent=0 // pred_fallthru
    _
  %v29 = vld [vmem:[%s0] sm:$0xf]
  %v30 = vld [vmem:[%s1] sm:$0xf]
  %v31 = vld [vmem:[%s1 + $0x4] sm:$0xf]
  %v32 = vld [vmem:[%s2] sm:$0x1]
  %v34 = vlaneseq
  %v35 = vshrl.u32 %v34, 7
  %v36 = vsub.s32 0, %v35
  %v37 = vrot.slane %v32, %v36
  %v41 = vunpack.c.l.b16 %v30
  %v42 = vunpack.c.l.b16 %v31
  %v43 = vpack.c.b16 %v42, %v41
  %vm45 = vcmask 130048
  %v47 = vsel %vm45, %v29, 0
  %49 = vmatprep.subr.bf16.mxu0 0
  %50 = vmatpush1.bf16.msra.mxu0 %v43
  %51 = vmatprep.subr.bf16.mxu0 0
  %52 = vmatpush1.bf16.msra.mxu0 0
  %53 = vmatprep.subr.bf16.mxu0 0
  %54 = vmatpush1.bf16.msra.mxu0 0
  %55 = vmatprep.subr.bf16.mxu0 0
  %56 = vmatpush1.bf16.msra.mxu0 0
  %57 = vmatprep.subr.bf16.mxu0 0
  %58 = vmatpush1.bf16.msra.mxu0 0
  %59 = vmatprep.subr.bf16.mxu0 0
  %60 = vmatpush1.bf16.msra.mxu0 0
  %61 = vmatprep.subr.bf16.mxu0 0
  %62 = vmatpush1.bf16.msra.mxu0 0
  %63 = vmatprep.subr.bf16.mxu0 0
  %64 = vmatpush1.bf16.msra.mxu0 0
  %65 = vmatprep.subr.bf16.mxu0 0
  %66 = vmatpush1.bf16.msra.mxu0 0
  %67 = vmatprep.subr.bf16.mxu0 0
  %68 = vmatpush1.bf16.msra.mxu0 0
  %69 = vmatprep.subr.bf16.mxu0 0
  %70 = vmatpush1.bf16.msra.mxu0 0
  %71 = vmatprep.subr.bf16.mxu0 0
  %72 = vmatpush1.bf16.msra.mxu0 0
  %73 = vmatprep.subr.bf16.mxu0 0
  %74 = vmatpush1.bf16.msra.mxu0 0
  %75 = vmatprep.subr.bf16.mxu0 0
  %76 = vmatpush1.bf16.msra.mxu0 0
  %77 = vmatprep.subr.bf16.mxu0 0
  %78 = vmatpush1.bf16.msra.mxu0 0
  %79 = vmatprep.subr.bf16.mxu0 0
  %80 = vmatpush1.bf16.msra.mxu0 0
  %81 = vmatprep.mubr.bf16.mxu0 0
  %82 = vmatmul.mubr.bf16.gmra.mrb[0].mxu0 %v47
  %v83 = vpop.f32.mrb[0].mxu0
  %v84 = vadd.f32 %v37, %v83
  %v85 = vpop.f32.mrb[0].mxu0
  %v86 = vpop.f32.mrb[0].mxu0
  %v87 = vpop.f32.mrb[0].mxu0
  %88 = vdwg.mxu0
  %v89 = vmax.f32 %v84, 0.0
  %vm90 = vcmask 261120
  %v91 = vsel %vm90, %v89, 0.0
  %92 = vadd.xlane.f32.xlu0 %v91
  %v93 = vpop.xlane.xlu0 %92
  %v94 = vmul.f32 %v93, 0.03125
  %v95 = vsub.f32 %v89, %v94
  %v96 = vmul.f32 %v95, %v95
  %v97 = vsel %vm90, %v96, 0.0
  %98 = vadd.xlane.f32.xlu0 %v97
  %v99 = vpop.xlane.xlu0 %98
  %v100 = vmul.f32 %v99, 0.03125
  %v101 = vadd.f32 %v100, 1e-05
  %v102 = vrsqrt.pop %v101
  %v103 = vmul.f32 %v95, %v102
  %v104 = vld [vmem:[%s3] sm:$0x1]
  %v106 = vlaneseq
  %v107 = vshrl.u32 %v106, 7
  %v108 = vsub.s32 0, %v107
  %v109 = vrot.slane %v104, %v108
  %v111 = vmul.f32 %v103, %v109
  %v112 = vld [vmem:[%s4] sm:$0x1]
  %v114 = vlaneseq
  %v115 = vshrl.u32 %v114, 7
  %v116 = vsub.s32 0, %v115
  %v117 = vrot.slane %v112, %v116
  %v119 = vadd.f32 %v111, %v117
  %v120 = vpack.c.bf16 %v119, %v119
  %v121 = vld [vmem:[%s5] sm:$0xf]
  %v122 = vld [vmem:[%s5 + $0x4] sm:$0xf]
  %v123 = vld [vmem:[%s5 + $0x8] sm:$0xf]
  %v124 = vld [vmem:[%s5 + $0xc] sm:$0xf]
  %v125 = vld [vmem:[%s6] sm:$0x1]
  %v127 = vlaneseq
  %v128 = vshrl.u32 %v127, 7
  %v129 = vsub.s32 0, %v128
  %v130 = vrot.slane %v125, %v129
  %v136 = vunpack.c.l.b16 %v121
  %v137 = vunpack.c.l.b16 %v122
  %v138 = vunpack.c.l.b16 %v123
  %v139 = vunpack.c.l.b16 %v124
  %v140 = vpack.c.b16 %v137, %v136
  %v141 = vpack.c.b16 %v139, %v138
  %v145 = vsel %vm90, %v120, 0
  %147 = vmatprep.subr.bf16.mxu0 0
  %148 = vmatpush1.bf16.msra.mxu0 %v140
  %149 = vmatprep.subr.bf16.mxu0 0
  %150 = vmatpush1.bf16.msra.mxu0 %v141
  %151 = vmatprep.subr.bf16.mxu0 0
  %152 = vmatpush1.bf16.msra.mxu0 0
  %153 = vmatprep.subr.bf16.mxu0 0
  %154 = vmatpush1.bf16.msra.mxu0 0
  %155 = vmatprep.subr.bf16.mxu0 0
  %156 = vmatpush1.bf16.msra.mxu0 0
  %157 = vmatprep.subr.bf16.mxu0 0
  %158 = vmatpush1.bf16.msra.mxu0 0
  %159 = vmatprep.subr.bf16.mxu0 0
  %160 = vmatpush1.bf16.msra.mxu0 0
  %161 = vmatprep.subr.bf16.mxu0 0
  %162 = vmatpush1.bf16.msra.mxu0 0
  %163 = vmatprep.subr.bf16.mxu0 0
  %164 = vmatpush1.bf16.msra.mxu0 0
  %165 = vmatprep.subr.bf16.mxu0 0
  %166 = vmatpush1.bf16.msra.mxu0 0
  %167 = vmatprep.subr.bf16.mxu0 0
  %168 = vmatpush1.bf16.msra.mxu0 0
  %169 = vmatprep.subr.bf16.mxu0 0
  %170 = vmatpush1.bf16.msra.mxu0 0
  %171 = vmatprep.subr.bf16.mxu0 0
  %172 = vmatpush1.bf16.msra.mxu0 0
  %173 = vmatprep.subr.bf16.mxu0 0
  %174 = vmatpush1.bf16.msra.mxu0 0
  %175 = vmatprep.subr.bf16.mxu0 0
  %176 = vmatpush1.bf16.msra.mxu0 0
  %177 = vmatprep.subr.bf16.mxu0 0
  %178 = vmatpush1.bf16.msra.mxu0 0
  %179 = vmatprep.mubr.bf16.mxu0 0
  %180 = vmatmul.mubr.bf16.gmra.mrb[0].mxu0 %v145
  %v181 = vpop.f32.mrb[0].mxu0
  %v182 = vadd.f32 %v130, %v181
  %v183 = vpop.f32.mrb[0].mxu0
  %v184 = vpop.f32.mrb[0].mxu0
  %v185 = vpop.f32.mrb[0].mxu0
  %186 = vdwg.mxu0
  %v187 = vpack.c.bf16 %v182, %v182
  %188 = vst [vmem:[%s7] sm:$0xf] %v187
  %p189 = scmp.ne.s32.totalorder 0, 0
  // Predicated region
  $region30: #{dueling_dqn_forward.1} parent=0 // pred_check
    %p190 = pneg %p189
  $region31: #{dueling_dqn_forward.1} parent=0 // pred_check_branch
    %192 = sbr.rel (%p190) target = $region33
  $region32: #{dueling_dqn_forward.1} parent=0 // pred_region
    %v193 = vrot.slane %v182, 4
    %v194 = vadd.f32 %v182, %v193
    %v195 = vrot.slane %v194, 2
    %v196 = vadd.f32 %v194, %v195
    %v197 = vrot.slane %v196, 1
    %v198 = vadd.f32 %v196, %v197
    %199 = vst [vmem:[%s8] sm:$0xff] %v198
  $region33: #{dueling_dqn_forward.1} parent=0 // pred_fallthru
    _
  %p200 = scmp.eq.s32.totalorder 0, 0
  // Predicated region
  $region34: #{dueling_dqn_forward.1} parent=0 // pred_check
    %p201 = pneg %p200
  $region35: #{dueling_dqn_forward.1} parent=0 // pred_check_branch
    %203 = sbr.rel (%p201) target = $region37
  $region36: #{dueling_dqn_forward.1} parent=0 // pred_region
    %s204 = smul.u32 0, 8
    %v205 = vlaneseq
    %v206 = vshrl.u32 %v205, 7
    %v207 = vstv %s204
    %v208 = vadd.s32 %v207, %v206
    %vm209 = vcmp.lt.s32.totalorder %v208, 2
    %v210 = vsel %vm209, 1, 0
    %v211 = vcvt.s32.f32 %v210
    %v212 = vmul.f32 %v182, %v211
    %v213 = vrot.slane %v212, 4
    %v214 = vadd.f32 %v212, %v213
    %v215 = vrot.slane %v214, 2
    %v216 = vadd.f32 %v214, %v215
    %v217 = vrot.slane %v216, 1
    %v218 = vadd.f32 %v216, %v217
    %219 = vst [vmem:[%s8] sm:$0xff] %v218
  $region37: #{dueling_dqn_forward.1} parent=0 // pred_fallthru
    _
  // Predicated region
  $region38: #{dueling_dqn_forward.1} parent=0 // pred_check
    _
  $region39: #{dueling_dqn_forward.1} parent=0 // pred_check_branch
    %221 = sbr.rel (0) target = $region41
  $region40: #{dueling_dqn_forward.1} parent=0 // pred_region
    _
  $region41: #{dueling_dqn_forward.1} parent=0 // pred_fallthru
    _
  // Predicated region
  $region42: #{dueling_dqn_forward.1} parent=0 // pred_check
    _
  $region43: #{dueling_dqn_forward.1} parent=0 // pred_check_branch
    %223 = sbr.rel (0) target = $region45
  $region44: #{dueling_dqn_forward.1} parent=0 // pred_region
    _
  $region45: #{dueling_dqn_forward.1} parent=0 // pred_fallthru
    _
  // Predicated region
  $region46: #{dueling_dqn_forward.1} parent=0 // pred_check
    _
  $region47: #{dueling_dqn_forward.1} parent=0 // pred_check_branch
    %225 = sbr.rel (0) target = $region49
  $region48: #{dueling_dqn_forward.1} parent=0 // pred_region
    _
  $region49: #{dueling_dqn_forward.1} parent=0 // pred_fallthru
    _
  // Predicated region
  $region50: #{dueling_dqn_forward.1} parent=0 // pred_check
    _
  $region51: #{dueling_dqn_forward.1} parent=0 // pred_check_branch
    %227 = sbr.rel (0) target = $region53
  $region52: #{dueling_dqn_forward.1} parent=0 // pred_region
    _
  $region53: #{dueling_dqn_forward.1} parent=0 // pred_fallthru
    _

</llo_original>
